<compile_context>
chip_gen: v5e
topology: v5e:2x2
jax: 0.10.0
libtpu: 0.0.40
codegen_flags: <defaults>
</compile_context>

<pallas_src>
import functools

import jax
import jax.numpy as jnp
from jax.experimental import pallas as pl
from jax.experimental.pallas import tpu as pltpu


def _round_up(x, m):
    return ((x + m - 1) // m) * m


def _classifier_kernel(x_ref, w_ref, b_ref, o_ref):
    # x_ref: (tm, K), w_ref: (K, N), b_ref: (1, N), o_ref: (tm, N)
    logits = (
        jnp.dot(x_ref[...], w_ref[...], preferred_element_type=jnp.float32)
        + b_ref[...]
    )
    # Numerically stable log_softmax over the (unpadded) last dim.
    m = jnp.max(logits, axis=-1, keepdims=True)
    shifted = logits - m
    lse = jnp.log(jnp.sum(jnp.exp(shifted), axis=-1, keepdims=True))
    o_ref[...] = (shifted - lse).astype(o_ref.dtype)


def _vmem_footprint_bytes(tile_m, K, N, x_itemsize, w_itemsize, out_itemsize):
    """Conservative VMEM estimate using lane/sublane-padded buffer sizes."""
    Kp = _round_up(K, 128)        # x tile lane padding
    Np = _round_up(N, 128)        # weight / bias / out / temps lane padding
    tm = _round_up(tile_m, 8)
    x_tile = tm * Kp * x_itemsize
    o_tile = tm * Np * out_itemsize
    w_buf = _round_up(K, 8) * Np * w_itemsize
    b_buf = 8 * Np * 4
    temps = 4 * tm * Np * 4       # f32 logits / exp / shifted / reduction temps
    # x, out, w, b blocks are double-buffered by the pipeline.
    return 2 * (x_tile + o_tile + w_buf + b_buf) + temps


def _pick_tile_m(M, K, N, x_itemsize, w_itemsize, out_itemsize):
    """Largest row tile inside a ~28 MiB working budget; >= 2 grid steps once
    M >= 64 so both v7x TensorCores get work."""
    budget = 28 * 1024 * 1024
    Kp = _round_up(K, 128)
    Np = _round_up(N, 128)
    fixed = 2 * (_round_up(K, 8) * Np * w_itemsize + 8 * Np * 4)
    per_row = 2 * Kp * x_itemsize + 2 * Np * out_itemsize + 4 * Np * 4
    cap = (budget - fixed) // per_row
    cap = max(8, (cap // 8) * 8)
    cap = min(cap, 4096)          # amortizes ~0.35 us/step overhead; tiny footprint

    if M < 64:
        tile = M                  # single full-extent block (layout-legal)
    else:
        tile = min(cap, _round_up(pl.cdiv(M, 2), 8))   # >= 2 steps (v7x megacore)
    return int(max(tile, 1))


@functools.partial(
    jax.jit, static_argnames=("tile_m", "out_dtype", "vmem_limit")
)
def _classifier_call(x2, w, b2, *, tile_m, out_dtype, vmem_limit):
    M, K = x2.shape
    N = w.shape[1]
    grid = (pl.cdiv(M, tile_m),)  # ragged last block handled by Pallas

    return pl.pallas_call(
        _classifier_kernel,
        out_shape=jax.ShapeDtypeStruct((M, N), out_dtype),
        grid_spec=pltpu.PrefetchScalarGridSpec(
            num_scalar_prefetch=0,
            grid=grid,
            in_specs=[
                pl.BlockSpec((tile_m, K), lambda i: (i, 0)),
                pl.BlockSpec((K, N), lambda i: (0, 0)),
                pl.BlockSpec((1, N), lambda i: (0, 0)),
            ],
            out_specs=pl.BlockSpec((tile_m, N), lambda i: (i, 0)),
        ),
        compiler_params=pltpu.CompilerParams(
            dimension_semantics=("parallel",),
            vmem_limit_bytes=vmem_limit,
        ),
    )(x2, w, b2)


def classifier_forward(x, w, b, *, tile_m=None, compute_dtype=None, out_dtype=None):
    """x: [..., K]; w: [K, N] (transpose of torch's [out, in]); b: [N].
    Returns log-probs with shape [..., N].

    compute_dtype=jnp.bfloat16 casts x/w for the matmul (accumulation stays
    f32); out_dtype=jnp.bfloat16 halves the output HBM stream when tolerated.
    """
    *lead, K = x.shape
    N = w.shape[1]
    if out_dtype is None:
        out_dtype = x.dtype
    if compute_dtype is not None:
        x = x.astype(compute_dtype)
        w = w.astype(compute_dtype)

    x2 = x.reshape(-1, K)
    M = x2.shape[0]
    b2 = b.astype(jnp.float32).reshape(1, N)

    x_isz = x2.dtype.itemsize
    w_isz = w.dtype.itemsize
    o_isz = jnp.dtype(out_dtype).itemsize
    if tile_m is None:
        tile_m = _pick_tile_m(M, K, N, x_isz, w_isz, o_isz)

    footprint = _vmem_footprint_bytes(tile_m, K, N, x_isz, w_isz, o_isz)
    # Never grant less than the 32 MiB scoped default; cap at 48 MiB (v7x-safe,
    # also lifts v5e's 16 MiB default when large tiles need it).
    vmem_limit = int(min(48 << 20, max(32 << 20, footprint * 3 // 2 + (2 << 20))))

    out = _classifier_call(
        x2, w, b2, tile_m=int(tile_m), out_dtype=out_dtype, vmem_limit=vmem_limit
    )
    return out.reshape(*lead, N)


def init_classifier_params(key, input_size, out_neurons):
    """Deterministic init mimicking torch.nn.Linear (uniform +/- 1/sqrt(fan_in)).
    Weight is stored pre-transposed [in, out] in the kernel's layout."""
    kw, kb = jax.random.split(key)
    bound = 1.0 / jnp.sqrt(jnp.float32(input_size))
    w = jax.random.uniform(
        kw, (input_size, out_neurons), jnp.float32, -bound, bound
    )
    b = jax.random.uniform(kb, (out_neurons,), jnp.float32, -bound, bound)
    return w, b


if __name__ == "__main__":
    batch, seq, input_size, out_neurons = 2, 8, 32, 10

    key = jax.random.PRNGKey(0)
    kx, kp = jax.random.split(key)
    x = jax.random.normal(kx, (batch, seq, input_size), jnp.float32)
    w, b = init_classifier_params(kp, input_size, out_neurons)

    # Small case: single grid step, f32.
    out = jax.block_until_ready(classifier_forward(x, w, b))
    ref = jax.nn.log_softmax(x @ w + b, axis=-1)
    assert out.shape == (batch, seq, out_neurons)
    assert jnp.allclose(out, ref, atol=1e-5, rtol=1e-5)

    # Larger case: >= 2 grid steps with a ragged last row-block (no jnp.pad of x).
    x_big = jax.random.normal(
        jax.random.PRNGKey(1), (3, 700, input_size), jnp.float32
    )
    out_big = jax.block_until_ready(classifier_forward(x_big, w, b))
    ref_big = jax.nn.log_softmax(x_big @ w + b, axis=-1)
    assert out_big.shape == (3, 700, out_neurons)
    assert jnp.allclose(out_big, ref_big, atol=1e-5, rtol=1e-5)

    # bf16 hot path: halved HBM traffic, f32 accumulation inside the MXU.
    out_bf16 = jax.block_until_ready(
        classifier_forward(
            x_big, w, b, compute_dtype=jnp.bfloat16, out_dtype=jnp.bfloat16
        )
    )
    ref_bf16 = jax.nn.log_softmax(
        jnp.dot(
            x_big.astype(jnp.bfloat16),
            w.astype(jnp.bfloat16),
            preferred_element_type=jnp.float32,
        )
        + b,
        axis=-1,
    )
    assert out_bf16.dtype == jnp.bfloat16
    assert jnp.allclose(
        out_bf16.astype(jnp.float32), ref_bf16, atol=1e-1, rtol=1e-1
    )

    print("KERNEL_OK")
</pallas_src>

<mosaic_0001>
module attributes {stable_mosaic.version = 11 : i64} {
  func.func @_classifier_kernel(%arg0: i32, %arg1: memref<16x32xf32, #tpu.memory_space<vmem>>, %arg2: memref<32x10xf32, #tpu.memory_space<vmem>>, %arg3: memref<1x10xf32, #tpu.memory_space<vmem>>, %arg4: memref<16x10xf32, #tpu.memory_space<vmem>>) attributes {dimension_semantics = [#tpu.dimension_semantics<parallel>], iteration_bounds = array<i64: 1>, scalar_prefetch = 0 : i64, scratch_operands = 0 : i64, tpu.core_type = #tpu.core_type<tc>, window_params = [{transform_indices = @transform_0, window_bounds = array<i64: 16, 32>}, {pipeline_mode = #tpu.pipeline_mode<synchronous>, transform_indices = @transform_1, window_bounds = array<i64: 32, 10>}, {pipeline_mode = #tpu.pipeline_mode<synchronous>, transform_indices = @transform_2, window_bounds = array<i64: 1, 10>}, {transform_indices = @transform_3, window_bounds = array<i64: 16, 10>}]} {
    %c0 = arith.constant 0 : index
    %c0_0 = arith.constant 0 : index
    %0 = vector.load %arg1[%c0, %c0_0] : memref<16x32xf32, #tpu.memory_space<vmem>>, vector<16x32xf32>
    %c0_1 = arith.constant 0 : index
    %c0_2 = arith.constant 0 : index
    %1 = vector.load %arg2[%c0_1, %c0_2] : memref<32x10xf32, #tpu.memory_space<vmem>>, vector<32x10xf32>
    %cst = arith.constant dense<0.000000e+00> : vector<16x10xf32>
    %2 = tpu.matmul %0, %1, %cst {dimension_numbers = #tpu.dot_dimension_numbers<[1], [0], [0], [1], [0, 0, 1, 1], [], []>} : vector<16x32xf32>, vector<32x10xf32>, vector<16x10xf32> -> vector<16x10xf32>
    %c0_3 = arith.constant 0 : index
    %c0_4 = arith.constant 0 : index
    %3 = vector.load %arg3[%c0_3, %c0_4] : memref<1x10xf32, #tpu.memory_space<vmem>>, vector<1x10xf32>
    %4 = vector.broadcast %3 : vector<1x10xf32> to vector<16x10xf32>
    %5 = arith.addf %2, %4 : vector<16x10xf32>
    %cst_5 = arith.constant dense<0xFF800000> : vector<16xf32>
    %6 = vector.multi_reduction <maximumf>, %5, %cst_5 [1] : vector<16x10xf32> to vector<16xf32>
    %7 = vector.shape_cast %6 : vector<16xf32> to vector<16x1xf32>
    %8 = vector.broadcast %7 : vector<16x1xf32> to vector<16x10xf32>
    %9 = arith.subf %5, %8 : vector<16x10xf32>
    %10 = math.exp %9 : vector<16x10xf32>
    %cst_6 = arith.constant dense<0.000000e+00> : vector<16xf32>
    %11 = vector.multi_reduction <add>, %10, %cst_6 [1] : vector<16x10xf32> to vector<16xf32>
    %12 = vector.shape_cast %11 : vector<16xf32> to vector<16x1xf32>
    %13 = math.log %12 : vector<16x1xf32>
    %14 = vector.broadcast %13 : vector<16x1xf32> to vector<16x10xf32>
    %15 = arith.subf %9, %14 : vector<16x10xf32>
    %c0_7 = arith.constant 0 : index
    %c0_8 = arith.constant 0 : index
    %16 = vector.load %arg4[%c0_7, %c0_8] : memref<16x10xf32, #tpu.memory_space<vmem>>, vector<16x10xf32>
    tpu.vector_store %arg4[%c0_7, %c0_8], %15 {strides = array<i32>} : memref<16x10xf32, #tpu.memory_space<vmem>>, vector<16x10xf32>,
    return
  }
  func.func @transform_0(%arg0: i32) -> (i32, i32) {
    %c0_i32 = arith.constant 0 : i32
    %c0_i32_0 = arith.constant 0 : i32
    return %arg0, %c0_i32 : i32, i32
  }
  func.func @transform_1(%arg0: i32) -> (i32, i32) {
    %c0_i32 = arith.constant 0 : i32
    %c0_i32_0 = arith.constant 0 : i32
    %c0_i32_1 = arith.constant 0 : i32
    return %c0_i32, %c0_i32_0 : i32, i32
  }
  func.func @transform_2(%arg0: i32) -> (i32, i32) {
    %c0_i32 = arith.constant 0 : i32
    %c0_i32_0 = arith.constant 0 : i32
    %c0_i32_1 = arith.constant 0 : i32
    return %c0_i32, %c0_i32_0 : i32, i32
  }
  func.func @transform_3(%arg0: i32) -> (i32, i32) {
    %c0_i32 = arith.constant 0 : i32
    %c0_i32_0 = arith.constant 0 : i32
    return %arg0, %c0_i32 : i32, i32
  }
}

</mosaic_0001>

<llo_original>
// kernel: _classifier_call.1
$region0: #{_classifier_call.1}
  #allocation0 [shape = 'u32[]', space=smem, size = 0x4, offset = 0x4, fixed_abs, tag = 'smem constant byte address 0x4 - core index']
  #allocation1 [shape = 'u32[72,128]{1,0:T(1,128)}', space=vmem, size = 0x9000, scoped, tag = 'internal scratch']
  %s0 = inlined_call_operand.vmem [shape: f32[16,32], index: 0, kind: input, shape index: {}]
  %s1 = inlined_call_operand.vmem [shape: f32[32,10], index: 1, kind: input, shape index: {}]
  %s2 = inlined_call_operand.vmem [shape: f32[1,10], index: 2, kind: input, shape index: {}]
  %s3 = inlined_call_operand.hbm [shape: f32[16,10], index: 3, kind: output, shape index: {}]
  %s4 = sld [smem:[#allocation0]]
  $region22: #{_classifier_call.1} parent=0
    _
  %s6 = ssub.s32 1, %s4
  %s7 = scalar_select 0, %s6, %s4
  $region1: #{_classifier_call.1} parent=0
    #allocation2 [shape = 'u8[8192]{0}', space=vmem, size = 0x2000, scoped, tag = 'output window, operand 0, single buffered']
    #allocation3 [shape = 's32[1]{0}', space=sflag, size = 0x4, scoped, tag = 'scoped memory for _classifier_call.1']
    %8 = vsyncpa [#allocation3], 0
    // Predicated region
    $region2: #{_classifier_call.1} parent=1 // pred_check
      _
    $region3: #{_classifier_call.1} parent=1 // pred_check_branch
      %10 = sbr.rel (0) target = $region5
    $region4: #{_classifier_call.1} parent=1 // pred_region
      _
    $region5: #{_classifier_call.1} parent=1 // pred_fallthru
      _
    // Predicated region
    $region6: #{_classifier_call.1} parent=1 // pred_check
      _
    $region7: #{_classifier_call.1} parent=1 // pred_check_branch
      %12 = sbr.rel (0) target = $region9
    $region8: #{_classifier_call.1} parent=1 // pred_region
      _
    $region9: #{_classifier_call.1} parent=1 // pred_fallthru
      _
    // Predicated region
    $region10: #{_classifier_call.1} parent=1 // pred_check
      _
    $region11: #{_classifier_call.1} parent=1 // pred_check_branch
      %14 = sbr.rel (0) target = $region13
    $region12: #{_classifier_call.1} parent=1 // pred_region
      _
    $region13: #{_classifier_call.1} parent=1 // pred_fallthru
      _
    %v15 = vld [vmem:[%s0] sm:$0xff]
    %v16 = vld [vmem:[%s0 + $0x8] sm:$0xff]
    %v17 = vld [vmem:[%s1] sm:$0xff]
    %v18 = vld [vmem:[%s1 + $0x8] sm:$0xff]
    %v19 = vld [vmem:[%s1 + $0x10] sm:$0xff]
    %v20 = vld [vmem:[%s1 + $0x18] sm:$0xff]
    %v21 = vld [vmem:[%s2] sm:$0x1]
    %v23 = vperm.slane %v21, 0
    %vm25 = vcmask 261120
    %v27 = vsel %vm25, %v15, 0
    %v30 = vsel %vm25, %v16, 0
    %32 = vmatpush.msra.mxu0 0.0
    %33 = vmatpush.msra.mxu0 0.0
    %34 = vmatpush.msra.mxu0 0.0
    %35 = vmatpush.msra.mxu0 0.0
    %36 = vmatpush.msra.mxu0 0.0
    %37 = vmatpush.msra.mxu0 0.0
    %38 = vmatpush.msra.mxu0 0.0
    %39 = vmatpush.msra.mxu0 0.0
    %40 = vmatpush.msra.mxu0 0.0
    %41 = vmatpush.msra.mxu0 0.0
    %42 = vmatpush.msra.mxu0 0.0
    %43 = vmatpush.msra.mxu0 0.0
    %44 = vmatpush.msra.mxu0 %v20
    %45 = vmatpush.msra.mxu0 %v19
    %46 = vmatpush.msra.mxu0 %v18
    %47 = vmatpush.msra.mxu0 %v17
    %48 = vmatmul.f32.gmra.mxu0 %v27
    %v49 = vpop.f32.mrf.mxu0
    %v50 = vadd.f32 %v23, %v49
    %51 = vmatmul.f32.gmra.mxu0 %v30
    %v52 = vpop.f32.mrf.mxu0
    %v53 = vadd.f32 %v23, %v52
    %54 = vdwg.mxu0
    %vm55 = vcmask 80896
    %v56 = vsel %vm55, %v50, -inf
    %57 = vmax.xlane.f32.xlu0 %v56
    %v58 = vpop.xlane.xlu0 %57
    %v59 = vsel %vm55, %v53, -inf
    %60 = vmax.xlane.f32.xlu0 %v59
    %v61 = vpop.xlane.xlu0 %60
    %v62 = vsub.f32 %v50, %v58
    %v63 = vsub.f32 %v53, %v61
    %v64 = vmul.f32 %v62, 1.442695
    %v65 = vpow.pop %v64
    %v66 = vmul.f32 %v63, 1.442695
    %v67 = vpow.pop %v66
    %v68 = vsel %vm55, %v65, 0.0
    %69 = vadd.xlane.f32.xlu0 %v68
    %v70 = vpop.xlane.xlu0 %69
    %v71 = vsel %vm55, %v67, 0.0
    %72 = vadd.xlane.f32.xlu0 %v71
    %v73 = vpop.xlane.xlu0 %72
    %v74 = vlog2.pop %v70
    %v75 = vmul.f32 %v74, 0.6931472
    %v76 = vlog2.pop %v73
    %v77 = vmul.f32 %v76, 0.6931472
    %v78 = vsub.f32 %v62, %v75
    %v79 = vsub.f32 %v63, %v77
    %80 = vst.msk [vmem:[#allocation2] sm:$0xff] %vm55, %v78
    %81 = vst.msk [vmem:[#allocation2 + $0x8] sm:$0xff] %vm55, %v79
    // Predicated region
    $region14: #{_classifier_call.1} parent=1 // pred_check
      _
    $region15: #{_classifier_call.1} parent=1 // pred_check_branch
      %83 = sbr.rel (0) target = $region17
    $region16: #{_classifier_call.1} parent=1 // pred_region
      %85 = vsyncadd [#allocation3], 0
      %s86 = sshll.u32 [#allocation2], 4
      %s87 = int_to_ptr.vmem [resolvable:$true] %s86
      %s88 = sshll.u32 %s3, 4
      %s89 = int_to_ptr.hbm [resolvable:$true] %s88
      %94 = dma.vmem_to_hbm [thread:$0]  %s87, 256, %s89, [#allocation3], 128, 128, 8
    $region17: #{_classifier_call.1} parent=1 // pred_fallthru
      _
    // Predicated region
    $region18: #{_classifier_call.1} parent=1 // pred_check
      _
    $region19: #{_classifier_call.1} parent=1 // pred_check_branch
      %96 = sbr.rel (0) target = $region21
    $region20: #{_classifier_call.1} parent=1 // pred_region
      %98 = dma.done [#allocation3], 256
    $region21: #{_classifier_call.1} parent=1 // pred_fallthru
      _
    %99 = vsyncpa [#allocation3], 1

</llo_original>
